<compile_context>
chip_gen: v5e
topology: v5e:2x2
jax: 0.10.0
libtpu: 0.0.40
codegen_flags: <defaults>
</compile_context>

<pallas_src>
import functools

import jax
import jax.numpy as jnp
from jax.experimental import pallas as pl
from jax.experimental.pallas import tpu as pltpu


def _fixed_pow(base, gamma):
    """base ** gamma.

    Small non-negative integer gamma (ASL defaults 0 and 4): VALU repeated
    squaring -- no per-element EUP exp/log, and pow(0, 0) == 1 like torch.pow.
    Non-integer gamma falls back to jnp.power on a clamped base.
    """
    g = float(gamma)
    gi = int(round(g))
    if abs(g - gi) < 1e-12 and 0 <= gi <= 16:
        if gi == 0:
            return jnp.float32(1.0)
        acc = None
        cur = base
        n = gi
        while n:
            if n & 1:
                acc = cur if acc is None else acc * cur
            n >>= 1
            if n:
                cur = cur * cur
        return acc
    # TODO(synk): non-integer gamma deviates slightly from torch.pow near 0
    # because of the 1e-12 clamp (the integer fast path above is exact).
    return jnp.power(jnp.maximum(base, 1e-12), g)


def _asl_tile_kernel(x_ref, t_ref, out_ref, *, gamma_pos, gamma_neg, eps,
                     num_classes, batch):
    x = x_ref[...].astype(jnp.float32)           # (tb, C) logits, upcast in-kernel
    t = t_ref[...]                               # (tb, 1) int32 label, -1 = dropped
    tb, c = x.shape

    # Row validity for the (possibly out-of-bounds) tail tile + user mask.
    row = pl.program_id(0) * tb + jax.lax.broadcasted_iota(jnp.int32, (tb, 1), 0)
    keep = jnp.logical_and(row < batch, t >= 0)  # (tb, 1) bool

    # log-softmax pieces; exp evaluated exactly once per element.
    x_max = jnp.max(x, axis=-1, keepdims=True)
    shifted = x - x_max
    exp_shifted = jnp.exp(shifted)                            # single EUP pass
    sum_e = jnp.sum(exp_shifted, axis=-1, keepdims=True)      # (tb, 1)
    log_preds = shifted - jnp.log(sum_e)                      # log_softmax
    probs = exp_shifted * (1.0 / sum_e)                       # softmax (reuses exp)

    # one-hot membership as a bool compare -- no f32 one-hot materialized.
    class_ids = jax.lax.broadcasted_iota(jnp.int32, (tb, c), 1)
    is_target = class_ids == t                                # (tb, C) bool

    # Label smoothing + asymmetric focal weight folded into ONE select.
    smooth_on = jnp.float32(1.0 - eps + eps / num_classes)
    smooth_off = jnp.float32(eps / num_classes)
    if float(gamma_pos) == 0.0:
        # default path: (1 - p_t) ** 0 == 1, so target coeff is just smooth_on.
        w_neg = _fixed_pow(probs, gamma_neg)
        coeff = jnp.where(is_target, smooth_on, smooth_off * w_neg)
    else:
        w_pos = _fixed_pow(1.0 - probs, gamma_pos)
        w_neg = _fixed_pow(probs, gamma_neg)
        coeff = jnp.where(is_target, smooth_on * w_pos, smooth_off * w_neg)

    per_row = jnp.sum(coeff * log_preds, axis=-1, keepdims=True)   # (tb, 1)
    # select (NOT multiply) so garbage tail rows can't propagate NaN/Inf.
    loss_rows = jnp.where(keep, -per_row, 0.0)

    loss_sum = jnp.sum(loss_rows)                  # scalar partial loss
    count_sum = jnp.sum(keep.astype(jnp.float32))  # scalar partial row count

    lane = jax.lax.broadcasted_iota(jnp.int32, (1, 1, 128), 2)
    out_ref[...] = jnp.where(lane == 0, loss_sum,
                             jnp.where(lane == 1, count_sum, 0.0))


def _choose_batch_tile(batch, n_classes, in_itemsize):
    # VMEM per batch row inside one grid step (class axis is lane-padded to
    # a multiple of 128 in VMEM):
    #   * double-buffered logits input in the input dtype
    #   * ~8 live f32 (tb, C) temporaries (upcast, exp, log_preds, probs, ...)
    #   * double-buffered (tb, 1) target block, lane-padded to 128 lanes
    c_pad = -(-n_classes // 128) * 128
    per_row = c_pad * (2 * in_itemsize + 8 * 4) + 2 * 128 * 4
    budget = 20 * 1024 * 1024           # headroom under the 32 MiB scoped limit
    tb = budget // per_row
    # keep each logits DMA in the ~0.5-4 MiB sweet spot
    tb = min(tb, max(16, (4 * 1024 * 1024) // max(1, n_classes * in_itemsize)))
    # >= 2 grid steps when the batch allows it -> both v7x TensorCores get work
    if batch > 16:
        tb = min(tb, -(-batch // 2))
    tb = max(16, (tb // 16) * 16)       # sublane packing (also OK for bf16)
    tb = min(tb, -(-batch // 16) * 16)  # never (much) larger than the batch
    return int(tb)


def asl_loss(x, y, mask, *, num_classes, gamma_positive=0.0,
             gamma_negative=4.0, eps=0.1, tile_b=None):
    """JAX/Pallas equivalent of ASLLoss.forward(x, y, mask, device).

    x:    (B, C) float logits (f32 or bf16; upcast happens inside the kernel)
    y:    (B,) integer labels (1-based when num_classes > 2, as in the module)
    mask: (B,) 0/1 row selector
    Returns scalar f32 loss = mean over rows with mask == 1.
    (All-zero mask yields NaN, same as the PyTorch reference.)
    """
    batch, c = x.shape
    y = y.astype(jnp.int32)
    if num_classes > 2:
        y = y - 1                                   # label shift from ASLLoss.forward
    # Fold the row mask into the target index: dropped rows -> -1.
    t = jnp.where(mask.astype(jnp.int32) == 1, y, -1).reshape(batch, 1)

    if tile_b is not None:
        tb = max(16, -(-int(tile_b) // 16) * 16)
    else:
        tb = _choose_batch_tile(batch, c, jnp.dtype(x.dtype).itemsize)
    n_tiles = pl.cdiv(batch, tb)

    kernel = functools.partial(
        _asl_tile_kernel,
        gamma_pos=float(gamma_positive),
        gamma_neg=float(gamma_negative),
        eps=float(eps),
        num_classes=c,                              # true C (classes never padded)
        batch=batch,
    )

    partial_sums = pl.pallas_call(
        kernel,
        out_shape=jax.ShapeDtypeStruct((n_tiles, 1, 128), jnp.float32),
        grid_spec=pltpu.PrefetchScalarGridSpec(
            num_scalar_prefetch=0,
            grid=(n_tiles,),
            in_specs=[
                pl.BlockSpec((tb, c), lambda i: (i, 0)),   # logits tile
                pl.BlockSpec((tb, 1), lambda i: (i, 0)),   # target/mask column
            ],
            out_specs=pl.BlockSpec((1, 1, 128), lambda i: (i, 0, 0)),
        ),
        compiler_params=pltpu.CompilerParams(
            dimension_semantics=("parallel",),
            vmem_limit_bytes=32 * 1024 * 1024),
    )(x, t)

    # Tiny n_tiles-length glue: masked mean == sum(masked loss) / sum(mask).
    return jnp.sum(partial_sums[:, 0, 0]) / jnp.sum(partial_sums[:, 0, 1])


def _reference(x, y, mask, *, num_classes, gamma_positive, gamma_negative,
               eps=0.1):
    # pure-JAX reference mirroring the PyTorch code (for sanity only)
    keep = mask == 1
    x = x.astype(jnp.float32)
    y = y.astype(jnp.int32)
    if num_classes > 2:
        y = y - 1
    log_preds = jax.nn.log_softmax(x, axis=-1)
    targets = jax.nn.one_hot(y, x.shape[-1], dtype=x.dtype)
    anti = 1.0 - targets
    xs_pos = jnp.exp(log_preds) * targets
    xs_neg = (1.0 - jnp.exp(log_preds)) * anti
    w = jnp.power(1.0 - xs_pos - xs_neg,
                  gamma_positive * targets + gamma_negative * anti)
    lp = log_preds * w
    tc = targets * (1.0 - eps) + eps / x.shape[-1]
    per_row = jnp.sum(-tc * lp, axis=-1)
    kf = keep.astype(jnp.float32)
    return jnp.sum(per_row * kf) / jnp.sum(kf)


if __name__ == "__main__":
    key = jax.random.PRNGKey(0)

    # --- test 1: default gammas, f32 logits, auto tile (2 tiles, tail rows OOB)
    B, C = 24, 16
    kx, ky, km = jax.random.split(key, 3)
    x = jax.random.normal(kx, (B, C), dtype=jnp.float32)
    y = jax.random.randint(ky, (B,), minval=1, maxval=C + 1, dtype=jnp.int32)
    mask = (jax.random.uniform(km, (B,)) > 0.3).astype(jnp.int32)
    mask = mask.at[0].set(1)                 # guarantee at least one kept row

    loss = asl_loss(x, y, mask, num_classes=C,
                    gamma_positive=0.0, gamma_negative=4.0, eps=0.1)
    loss = jax.block_until_ready(loss)
    ref = _reference(x, y, mask, num_classes=C,
                     gamma_positive=0.0, gamma_negative=4.0, eps=0.1)
    assert jnp.allclose(loss, ref, rtol=1e-5, atol=1e-5), (loss, ref)

    # --- test 2: bf16 logits, forced 2-step grid with an out-of-bounds tail
    B2, C2 = 22, 16
    k2x, k2y, k2m = jax.random.split(jax.random.PRNGKey(0), 3)
    x2 = jax.random.normal(k2x, (B2, C2), dtype=jnp.float32).astype(jnp.bfloat16)
    y2 = jax.random.randint(k2y, (B2,), minval=1, maxval=C2 + 1, dtype=jnp.int32)
    mask2 = (jax.random.uniform(k2m, (B2,)) > 0.4).astype(jnp.int32)
    mask2 = mask2.at[0].set(1)

    loss2 = asl_loss(x2, y2, mask2, num_classes=C2,
                     gamma_positive=1.0, gamma_negative=3.0, eps=0.1,
                     tile_b=16)              # forces a 2-step grid
    loss2 = jax.block_until_ready(loss2)
    ref2 = _reference(x2, y2, mask2, num_classes=C2,
                      gamma_positive=1.0, gamma_negative=3.0, eps=0.1)
    assert jnp.allclose(loss2, ref2, rtol=1e-5, atol=1e-5), (loss2, ref2)

    # --- test 3: class count not a multiple of 128 (lane-padding correctness)
    B3, C3 = 16, 1000
    k3x, k3y, k3m = jax.random.split(jax.random.PRNGKey(1), 3)
    x3 = jax.random.normal(k3x, (B3, C3), dtype=jnp.float32)
    y3 = jax.random.randint(k3y, (B3,), minval=1, maxval=C3 + 1, dtype=jnp.int32)
    mask3 = (jax.random.uniform(k3m, (B3,)) > 0.3).astype(jnp.int32)
    mask3 = mask3.at[0].set(1)

    loss3 = asl_loss(x3, y3, mask3, num_classes=C3,
                     gamma_positive=0.0, gamma_negative=4.0, eps=0.1)
    loss3 = jax.block_until_ready(loss3)
    ref3 = _reference(x3, y3, mask3, num_classes=C3,
                      gamma_positive=0.0, gamma_negative=4.0, eps=0.1)
    assert jnp.allclose(loss3, ref3, rtol=1e-5, atol=1e-5), (loss3, ref3)

    print("KERNEL_OK")
</pallas_src>

<mosaic_0001>
module attributes {stable_mosaic.version = 11 : i64} {
  func.func @_asl_tile_kernel(%arg0: i32, %arg1: memref<16x16xf32, #tpu.memory_space<vmem>>, %arg2: memref<16x1xi32, #tpu.memory_space<vmem>>, %arg3: memref<1x1x128xf32, #tpu.memory_space<vmem>>) attributes {dimension_semantics = [#tpu.dimension_semantics<parallel>], iteration_bounds = array<i64: 2>, scalar_prefetch = 0 : i64, scratch_operands = 0 : i64, tpu.core_type = #tpu.core_type<tc>, window_params = [{transform_indices = @transform_0, window_bounds = array<i64: 16, 16>}, {transform_indices = @transform_1, window_bounds = array<i64: 16, 1>}, {transform_indices = @transform_2, window_bounds = array<i64: 1, 1, 128>}]} {
    %c0 = arith.constant 0 : index
    %c0_0 = arith.constant 0 : index
    %0 = vector.load %arg1[%c0, %c0_0] : memref<16x16xf32, #tpu.memory_space<vmem>>, vector<16x16xf32>
    %c0_1 = arith.constant 0 : index
    %c0_2 = arith.constant 0 : index
    %1 = vector.load %arg2[%c0_1, %c0_2] : memref<16x1xi32, #tpu.memory_space<vmem>>, vector<16x1xi32>
    %c16_i32 = arith.constant 16 : i32
    %2 = arith.muli %arg0, %c16_i32 : i32
    %3 = tpu.iota {dimensions = array<i32: 0>} : vector<16x1xi32>
    %4 = vector.broadcast %2 : i32 to vector<16x1xi32>
    %5 = arith.addi %4, %3 : vector<16x1xi32>
    %c24_i32 = arith.constant 24 : i32
    %6 = vector.broadcast %c24_i32 : i32 to vector<16x1xi32>
    %7 = arith.cmpi slt, %5, %6 : vector<16x1xi32>
    %c0_i32 = arith.constant 0 : i32
    %8 = vector.broadcast %c0_i32 : i32 to vector<16x1xi32>
    %9 = arith.cmpi sge, %1, %8 : vector<16x1xi32>
    %10 = arith.andi %7, %9 : vector<16x1xi1>
    %cst = arith.constant dense<0xFF800000> : vector<16xf32>
    %11 = vector.multi_reduction <maximumf>, %0, %cst [1] : vector<16x16xf32> to vector<16xf32>
    %12 = vector.shape_cast %11 : vector<16xf32> to vector<16x1xf32>
    %13 = vector.broadcast %12 : vector<16x1xf32> to vector<16x16xf32>
    %14 = arith.subf %0, %13 : vector<16x16xf32>
    %15 = math.exp %14 : vector<16x16xf32>
    %cst_3 = arith.constant dense<0.000000e+00> : vector<16xf32>
    %16 = vector.multi_reduction <add>, %15, %cst_3 [1] : vector<16x16xf32> to vector<16xf32>
    %17 = vector.shape_cast %16 : vector<16xf32> to vector<16x1xf32>
    %18 = math.log %17 : vector<16x1xf32>
    %19 = vector.broadcast %18 : vector<16x1xf32> to vector<16x16xf32>
    %20 = arith.subf %14, %19 : vector<16x16xf32>
    %cst_4 = arith.constant 1.000000e+00 : f32
    %21 = vector.broadcast %cst_4 : f32 to vector<16x1xf32>
    %22 = arith.divf %21, %17 : vector<16x1xf32>
    %23 = vector.broadcast %22 : vector<16x1xf32> to vector<16x16xf32>
    %24 = arith.mulf %15, %23 : vector<16x16xf32>
    %25 = tpu.iota {dimensions = array<i32: 1>} : vector<16x16xi32>
    %26 = vector.broadcast %1 : vector<16x1xi32> to vector<16x16xi32>
    %27 = arith.cmpi eq, %25, %26 : vector<16x16xi32>
    %28 = arith.mulf %24, %24 : vector<16x16xf32>
    %29 = arith.mulf %28, %28 : vector<16x16xf32>
    %cst_5 = arith.constant 6.250000e-03 : f32
    %30 = vector.broadcast %cst_5 : f32 to vector<16x16xf32>
    %31 = arith.mulf %30, %29 : vector<16x16xf32>
    %cst_6 = arith.constant 9.062500e-01 : f32
    %32 = vector.broadcast %cst_6 : f32 to vector<16x16xf32>
    %33 = arith.select %27, %32, %31 : vector<16x16xi1>, vector<16x16xf32>
    %34 = arith.mulf %33, %20 : vector<16x16xf32>
    %cst_7 = arith.constant dense<0.000000e+00> : vector<16xf32>
    %35 = vector.multi_reduction <add>, %34, %cst_7 [1] : vector<16x16xf32> to vector<16xf32>
    %36 = vector.shape_cast %35 : vector<16xf32> to vector<16x1xf32>
    %cst_8 = arith.constant 0.000000e+00 : f32
    %37 = vector.broadcast %cst_8 : f32 to vector<16x1xf32>
    %38 = arith.subf %37, %36 : vector<16x1xf32>
    %cst_9 = arith.constant 0.000000e+00 : f32
    %39 = vector.broadcast %cst_9 : f32 to vector<16x1xf32>
    %40 = arith.select %10, %38, %39 : vector<16x1xi1>, vector<16x1xf32>
    %41 = vector.shape_cast %40 : vector<16x1xf32> to vector<1x16x1xf32>
    %cst_10 = arith.constant dense<0.000000e+00> : vector<1xf32>
    %42 = vector.multi_reduction <add>, %41, %cst_10 [1, 2] : vector<1x16x1xf32> to vector<1xf32>
    %43 = vector.shape_cast %42 : vector<1xf32> to vector<1x1x1xf32>
    %44 = vector.extract %43[0, 0, 0] : f32 from vector<1x1x1xf32>
    %45 = arith.extui %10 : vector<16x1xi1> to vector<16x1xi32>
    %46 = arith.sitofp %45 : vector<16x1xi32> to vector<16x1xf32>
    %47 = vector.shape_cast %46 : vector<16x1xf32> to vector<1x16x1xf32>
    %cst_11 = arith.constant dense<0.000000e+00> : vector<1xf32>
    %48 = vector.multi_reduction <add>, %47, %cst_11 [1, 2] : vector<1x16x1xf32> to vector<1xf32>
    %49 = vector.shape_cast %48 : vector<1xf32> to vector<1x1x1xf32>
    %50 = vector.extract %49[0, 0, 0] : f32 from vector<1x1x1xf32>
    %51 = tpu.iota {dimensions = array<i32: 2>} : vector<1x1x128xi32>
    %c0_i32_12 = arith.constant 0 : i32
    %52 = vector.broadcast %c0_i32_12 : i32 to vector<1x1x128xi32>
    %53 = arith.cmpi eq, %51, %52 : vector<1x1x128xi32>
    %c1_i32 = arith.constant 1 : i32
    %54 = vector.broadcast %c1_i32 : i32 to vector<1x1x128xi32>
    %55 = arith.cmpi eq, %51, %54 : vector<1x1x128xi32>
    %cst_13 = arith.constant 0.000000e+00 : f32
    %56 = vector.broadcast %50 : f32 to vector<1x1x128xf32>
    %57 = vector.broadcast %cst_13 : f32 to vector<1x1x128xf32>
    %58 = arith.select %55, %56, %57 : vector<1x1x128xi1>, vector<1x1x128xf32>
    %59 = vector.broadcast %44 : f32 to vector<1x1x128xf32>
    %60 = arith.select %53, %59, %58 : vector<1x1x128xi1>, vector<1x1x128xf32>
    %c0_14 = arith.constant 0 : index
    %c0_15 = arith.constant 0 : index
    %c0_16 = arith.constant 0 : index
    %61 = vector.load %arg3[%c0_14, %c0_15, %c0_16] : memref<1x1x128xf32, #tpu.memory_space<vmem>>, vector<1x1x128xf32>
    tpu.vector_store %arg3[%c0_14, %c0_15, %c0_16], %60 {strides = array<i32>} : memref<1x1x128xf32, #tpu.memory_space<vmem>>, vector<1x1x128xf32>,
    return
  }
  func.func @transform_0(%arg0: i32) -> (i32, i32) {
    %c0_i32 = arith.constant 0 : i32
    %c0_i32_0 = arith.constant 0 : i32
    return %arg0, %c0_i32 : i32, i32
  }
  func.func @transform_1(%arg0: i32) -> (i32, i32) {
    %c0_i32 = arith.constant 0 : i32
    %c0_i32_0 = arith.constant 0 : i32
    return %arg0, %c0_i32 : i32, i32
  }
  func.func @transform_2(%arg0: i32) -> (i32, i32, i32) {
    %c0_i32 = arith.constant 0 : i32
    %c0_i32_0 = arith.constant 0 : i32
    %c0_i32_1 = arith.constant 0 : i32
    return %arg0, %c0_i32, %c0_i32_0 : i32, i32, i32
  }
}

</mosaic_0001>

<llo_original>
// kernel: tpu_custom_call.1
$region0: #{tpu_custom_call.1}
  #allocation0 [shape = 'u32[]', space=smem, size = 0x4, offset = 0x4, fixed_abs, tag = 'smem constant byte address 0x4 - core index']
  #allocation1 [shape = 'u32[72,128]{1,0:T(1,128)}', space=vmem, size = 0x9000, scoped, tag = 'internal scratch']
  %s0 = inlined_call_operand.vmem [shape: f32[24,16], index: 0, kind: input, shape index: {}]
  %s1 = inlined_call_operand.vmem [shape: s32[24,1], index: 1, kind: input, shape index: {}]
  %s2 = inlined_call_operand.hbm [shape: f32[2,1,128], index: 2, kind: output, shape index: {}]
  %s3 = sld [smem:[#allocation0]]
  $region41: #{tpu_custom_call.1} parent=0
    _
  %s5 = ssub.s32 1, %s3
  %s6 = scalar_select 0, %s5, %s3
  $region1: #{tpu_custom_call.1} parent=0
    #allocation2 [shape = 'u8[1024]{0}', space=vmem, size = 0x400, scoped, tag = 'output window, operand 0']
    #allocation3 [shape = 's32[2]{0}', space=sflag, size = 0x8, scoped, tag = 'scoped memory for tpu_custom_call.1']
    %7 = vsyncpa [#allocation3], 0
    %s8 = scalar_lea.sflag [#allocation3], 1
    %9 = vsyncpa %s8, 0
    loop: start=0, step=1, limit=4
    $region2: #{tpu_custom_call.1} parent=1 // loop_pre_header
      _
    $region3: #{tpu_custom_call.1} parent=1 // loop_header
      %s11 = sphi 0, %s15
      %p12 = scmp.ge.s32.totalorder %s11, 4
      %s21 = sphi 0, %s23
      %s24 = sphi 0, %s21
      %s25 = sphi 0, %s24
      %s41 = sphi 0, %s25
      %s47 = sphi 0, %s49
      %s50 = sphi 0, %s47
      %s51 = sphi 0, %s50
      %s67 = sphi 0, %s51
      %s73 = sphi 0, %s75
      %s76 = sphi 0, %s73
      %s77 = sphi 0, %s76
      %s93 = sphi 0, %s77
    $region4: #{tpu_custom_call.1} parent=1 // loop_header_branch
      %14 = sbr.rel (%p12) target = $region8
    $region5: #{tpu_custom_call.1} parent=1 // loop_body
      %s16 = ssub.s32 %s11, 1
      %s17 = ssub.s32 %s11, 2
      %s18 = sadd.s32 %s11, 1
      %s19 = ssub.s32 %s11, %s18
      %p20 = scmp.eq.s32.totalorder %s19, 0
      %s22 = sadd.s32 %s21, 1
      %s23 = scalar_select %p20, %s21, %s22
      %p26 = pneg %p20
      %p27 = scmp.eq.s32.totalorder %s11, 1
      %p28 = por %p26, %p27
      %p29 = scmp.ne.s32.totalorder %s21, %s24
      %p30 = scmp.eq.s32.totalorder %s11, 0
      %p31 = por %p29, %p30
      %p32 = scmp.ne.s32.totalorder %s21, %s24
      %p33 = scmp.eq.s32.totalorder %s16, 1
      %p34 = por %p32, %p33
      %p35 = scmp.ne.s32.totalorder %s24, %s25
      %p36 = scmp.eq.s32.totalorder %s16, 0
      %p37 = por %p35, %p36
      %p38 = scmp.ne.s32.totalorder %s24, %s25
      %p39 = scmp.eq.s32.totalorder %s17, 1
      %p40 = por %p38, %p39
      %p42 = scmp.ne.s32.totalorder %s25, %s41
      %p43 = scmp.eq.s32.totalorder %s17, 0
      %p44 = por %p42, %p43
      %s45 = ssub.s32 %s11, %s18
      %p46 = scmp.eq.s32.totalorder %s45, 0
      %s48 = sadd.s32 %s47, 1
      %s49 = scalar_select %p46, %s47, %s48
      %p52 = pneg %p46
      %p53 = scmp.eq.s32.totalorder %s11, 1
      %p54 = por %p52, %p53
      %p55 = scmp.ne.s32.totalorder %s47, %s50
      %p56 = scmp.eq.s32.totalorder %s11, 0
      %p57 = por %p55, %p56
      %p58 = scmp.ne.s32.totalorder %s47, %s50
      %p59 = scmp.eq.s32.totalorder %s16, 1
      %p60 = por %p58, %p59
      %p61 = scmp.ne.s32.totalorder %s50, %s51
      %p62 = scmp.eq.s32.totalorder %s16, 0
      %p63 = por %p61, %p62
      %p64 = scmp.ne.s32.totalorder %s50, %s51
      %p65 = scmp.eq.s32.totalorder %s17, 1
      %p66 = por %p64, %p65
      %p68 = scmp.ne.s32.totalorder %s51, %s67
      %p69 = scmp.eq.s32.totalorder %s17, 0
      %p70 = por %p68, %p69
      %s71 = ssub.s32 %s11, %s18
      %p72 = scmp.eq.s32.totalorder %s71, 0
      %s74 = sadd.s32 %s73, 1
      %s75 = scalar_select %p72, %s73, %s74
      %p78 = pneg %p72
      %p79 = scmp.eq.s32.totalorder %s11, 1
      %p80 = por %p78, %p79
      %p81 = scmp.ne.s32.totalorder %s73, %s76
      %p82 = scmp.eq.s32.totalorder %s11, 0
      %p83 = por %p81, %p82
      %p84 = scmp.ne.s32.totalorder %s73, %s76
      %p85 = scmp.eq.s32.totalorder %s16, 1
      %p86 = por %p84, %p85
      %p87 = scmp.ne.s32.totalorder %s76, %s77
      %p88 = scmp.eq.s32.totalorder %s16, 0
      %p89 = por %p87, %p88
      %p90 = scmp.ne.s32.totalorder %s76, %s77
      %p91 = scmp.eq.s32.totalorder %s17, 1
      %p92 = por %p90, %p91
      %p94 = scmp.ne.s32.totalorder %s77, %s93
      %p95 = scmp.eq.s32.totalorder %s17, 0
      %p96 = por %p94, %p95
      %p97 = scmp.le.s32.totalorder 1, %s11
      %p98 = scmp.lt.s32.totalorder %s11, 3
      %p99 = pnand %p97, %p98
      %p100 = pneg %p99
      // Predicated region
      $region9: #{tpu_custom_call.1} parent=5 // pred_check
        _
      $region10: #{tpu_custom_call.1} parent=5 // pred_check_branch
        %102 = sbr.rel (%p99) target = $region12
      $region11: #{tpu_custom_call.1} parent=5 // pred_region
        %s103 = ssub.s32 %s11, 1
      $region12: #{tpu_custom_call.1} parent=5 // pred_fallthru
        _
      %p104 = scmp.lt.s32.totalorder %s11, 2
      // Predicated region
      $region13: #{tpu_custom_call.1} parent=5 // pred_check
        %p105 = pneg %p104
      $region14: #{tpu_custom_call.1} parent=5 // pred_check_branch
        %107 = sbr.rel (%p105) target = $region16
      $region15: #{tpu_custom_call.1} parent=5 // pred_region
        // Predicated region
        $region17: #{tpu_custom_call.1} parent=15 // pred_check
          %p108 = pneg %p31
        $region18: #{tpu_custom_call.1} parent=15 // pred_check_branch
          %110 = sbr.rel (%p108) target = $region20
        $region19: #{tpu_custom_call.1} parent=15 // pred_region
          %s111 = smul.u32 2, %s11
          %s112 = ssub.s32 3, %s111
          %p113 = scmp.lt.s32.totalorder %s112, 2
          %s114 = scalar_select %p113, %s112, 2
          %s115 = smul.u32 8, %s114
          %p116 = scmp.lt.s32.totalorder %s111, 2
          %s117 = scalar_select %p116, %s111, 2
          %s118 = smul.addr %s117, 8
          %s119 = scalar_lea.vmem %s0, %s118
          %s120 = smul.u32 2, %s11
          %s121 = ssub.s32 3, %s120
          %p122 = scmp.lt.s32.totalorder %s121, 2
          %s123 = scalar_select %p122, %s121, 2
          %s124 = smul.u32 8, %s123
        $region20: #{tpu_custom_call.1} parent=15 // pred_fallthru
          _
        // Predicated region
        $region21: #{tpu_custom_call.1} parent=15 // pred_check
          %p125 = pneg %p57
        $region22: #{tpu_custom_call.1} parent=15 // pred_check_branch
          %127 = sbr.rel (%p125) target = $region24
        $region23: #{tpu_custom_call.1} parent=15 // pred_region
          %s128 = smul.u32 2, %s11
          %s129 = ssub.s32 3, %s128
          %p130 = scmp.lt.s32.totalorder %s129, 2
          %s131 = scalar_select %p130, %s129, 2
          %s132 = smul.u32 8, %s131
          %p133 = scmp.lt.s32.totalorder %s128, 2
          %s134 = scalar_select %p133, %s128, 2
          %s135 = smul.addr %s134, 8
          %s136 = scalar_lea.vmem %s1, %s135
          %s137 = smul.u32 2, %s11
          %s138 = ssub.s32 3, %s137
          %p139 = scmp.lt.s32.totalorder %s138, 2
          %s140 = scalar_select %p139, %s138, 2
          %s141 = smul.u32 8, %s140
        $region24: #{tpu_custom_call.1} parent=15 // pred_fallthru
          _
      $region16: #{tpu_custom_call.1} parent=5 // pred_fallthru
        _
      %p142 = scmp.le.s32.totalorder 1, %s11
      %p143 = scmp.lt.s32.totalorder %s11, 3
      %p144 = pnand %p142, %p143
      %p145 = pneg %p144
      // Predicated region
      $region25: #{tpu_custom_call.1} parent=5 // pred_check
        _
      $region26: #{tpu_custom_call.1} parent=5 // pred_check_branch
        %147 = sbr.rel (%p144) target = $region28
      $region27: #{tpu_custom_call.1} parent=5 // pred_region
        %s148 = ssub.s32 %s11, 1
        %s149 = smul.u32 2, %s16
        %s150 = ssub.s32 3, %s149
        %p151 = scmp.lt.s32.totalorder %s150, 2
        %s152 = scalar_select %p151, %s150, 2
        %s153 = smul.u32 8, %s152
        %p154 = scmp.lt.s32.totalorder %s149, 2
        %s155 = scalar_select %p154, %s149, 2
        %s156 = smul.addr %s155, 8
        %s157 = scalar_lea.vmem %s0, %s156
        %p158 = pneg %p37
        %p159 = pneg %p34
        %s160 = smul.u32 2, %s16
        %s161 = ssub.s32 3, %s160
        %p162 = scmp.lt.s32.totalorder %s161, 2
        %s163 = scalar_select %p162, %s161, 2
        %s164 = smul.u32 8, %s163
        %p165 = scmp.lt.s32.totalorder %s160, 2
        %s166 = scalar_select %p165, %s160, 2
        %s167 = smul.addr %s166, 8
        %s168 = scalar_lea.vmem %s1, %s167
        %p169 = pneg %p63
        %p170 = pneg %p60
        %p171 = pneg %p89
        %p172 = pneg %p86
        %s173 = sand.u32 %s76, 1
        %s174 = scalar_lea.sflag [#allocation3], %s173
        %s175 = sand.u32 %s76, 1
        %s176 = scalar_lea.vmem [#allocation2], %s175
        %s177 = smul.u32 2, %s16
        %s178 = ssub.s32 3, %s177
        %p179 = scmp.lt.s32.totalorder %s178, 2
        %s180 = scalar_select %p179, %s178, 2
        %s181 = smul.u32 8, %s180
        %p182 = scmp.lt.s32.totalorder %s177, 2
        %s183 = scalar_select %p182, %s177, 2
        %s184 = smul.addr %s183, 8
        %s185 = scalar_lea.vmem %s0, %s184
        %s186 = smul.u32 2, %s16
        %s187 = ssub.s32 3, %s186
        %p188 = scmp.lt.s32.totalorder %s187, 2
        %s189 = scalar_select %p188, %s187, 2
        %s190 = smul.u32 8, %s189
        %s191 = smul.u32 2, %s16
        %s192 = ssub.s32 3, %s191
        %p193 = scmp.lt.s32.totalorder %s192, 2
        %s194 = scalar_select %p193, %s192, 2
        %s195 = smul.u32 8, %s194
        %p196 = scmp.lt.s32.totalorder %s191, 2
        %s197 = scalar_select %p196, %s191, 2
        %s198 = smul.addr %s197, 8
        %s199 = scalar_lea.vmem %s1, %s198
        %s200 = smul.u32 2, %s16
        %s201 = ssub.s32 3, %s200
        %p202 = scmp.lt.s32.totalorder %s201, 2
        %s203 = scalar_select %p202, %s201, 2
        %s204 = smul.u32 8, %s203
        %v205 = vld [vmem:[%s185] sm:$0xff]
        %v206 = vld [vmem:[%s185 + $0x8] sm:$0xff]
        %v207 = vld [vmem:[%s199] sm:$0xff]
        %v208 = vld [vmem:[%s199 + $0x8] sm:$0xff]
        %s209 = smul.u32 %s16, 16
        %v210 = vlaneseq
        %v211 = vshrl.u32 %v210, 7
        %v212 = vadd.s32 %v211, 8
        %v213 = vstv %s209
        %v214 = vadd.s32 %v213, %v211
        %v215 = vadd.s32 %v213, %v212
        %vm216 = vcmp.lt.s32.totalorder %v214, 24
        %vm217 = vcmp.lt.s32.totalorder %v215, 24
        %vm218 = vcmp.ge.s32.totalorder %v207, 0
        %vm219 = vcmp.ge.s32.totalorder %v208, 0
        %vm220 = vmand %vm216, %vm218
        %vm221 = vmand %vm217, %vm219
        %vm222 = vcmask 130048
        %v223 = vsel %vm222, %v205, -inf
        %224 = vmax.xlane.f32.xlu0 %v223
        %v225 = vpop.xlane.xlu0 %224
        %v226 = vsel %vm222, %v206, -inf
        %227 = vmax.xlane.f32.xlu0 %v226
        %v228 = vpop.xlane.xlu0 %227
        %v229 = vsub.f32 %v205, %v225
        %v230 = vsub.f32 %v206, %v228
        %v231 = vmul.f32 %v229, 1.442695
        %v232 = vpow.pop %v231
        %v233 = vmul.f32 %v230, 1.442695
        %v234 = vpow.pop %v233
        %v235 = vsel %vm222, %v232, 0.0
        %236 = vadd.xlane.f32.xlu0 %v235
        %v237 = vpop.xlane.xlu0 %236
        %v238 = vsel %vm222, %v234, 0.0
        %239 = vadd.xlane.f32.xlu0 %v238
        %v240 = vpop.xlane.xlu0 %239
        %v241 = vlog2.pop %v237
        %v242 = vmul.f32 %v241, 0.6931472
        %v243 = vlog2.pop %v240
        %v244 = vmul.f32 %v243, 0.6931472
        %v245 = vsub.f32 %v229, %v242
        %v246 = vsub.f32 %v230, %v244
        %v247 = vrcp.pop %v237
        %v248 = vmul.f32 %v237, %v247
        %v249 = vsub.f32 1.0, %v248
        %v250 = vmul.f32 %v247, %v249
        %v251 = vadd.f32 %v247, %v250
        %vm252 = vweird.f32 %v237
        %vm253 = vweird.f32 %v247
        %vm254 = vmor %vm252, %vm253
        %v255 = vsel %vm254, %v247, %v251
        %v256 = vand.u32 2147483647, %v237
        %vm257 = vcmp.eq.f32.partialorder %v256, 8.507059e+37
        %v258 = vand.u32 %v237, 2147483648
        %v259 = vor.u32 1.1754944e-38, %v258
        %v260 = vsel %vm257, %v259, %v255
        %v261 = vmul.f32 1.0, %v260
        %v262 = vrcp.pop %v240
        %v263 = vmul.f32 %v240, %v262
        %v264 = vsub.f32 1.0, %v263
        %v265 = vmul.f32 %v262, %v264
        %v266 = vadd.f32 %v262, %v265
        %vm267 = vweird.f32 %v240
        %vm268 = vweird.f32 %v262
        %vm269 = vmor %vm267, %vm268
        %v270 = vsel %vm269, %v262, %v266
        %v271 = vand.u32 2147483647, %v240
        %vm272 = vcmp.eq.f32.partialorder %v271, 8.507059e+37
        %v273 = vand.u32 %v240, 2147483648
        %v274 = vor.u32 1.1754944e-38, %v273
        %v275 = vsel %vm272, %v274, %v270
        %v276 = vmul.f32 1.0, %v275
        %v277 = vmul.f32 %v232, %v261
        %v278 = vmul.f32 %v234, %v276
        %v279 = vlaneseq
        %v280 = vand.u32 %v279, 127
        %281 = vset.pattern.permute.xlu0 0
        %282 = vperm.xlu0 %281, %v207
        %v283 = vpop.permute.xlu0 %282
        %284 = vset.pattern.permute.xlu0 0
        %285 = vperm.xlu0 %284, %v208
        %v286 = vpop.permute.xlu0 %285
        %vm287 = vcmp.eq.s32.totalorder %v280, %v283
        %vm288 = vcmp.eq.s32.totalorder %v280, %v286
        %v289 = vmul.f32 %v277, %v277
        %v290 = vmul.f32 %v278, %v278
        %v291 = vmul.f32 %v289, %v289
        %v292 = vmul.f32 %v290, %v290
        %v293 = vmul.f32 %v291, 0.00625
        %v294 = vmul.f32 %v292, 0.00625
        %v295 = vsel %vm287, 0.90625, %v293
        %v296 = vsel %vm288, 0.90625, %v294
        %v297 = vmul.f32 %v295, %v245
        %v298 = vmul.f32 %v296, %v246
        %v299 = vsel %vm222, %v297, 0.0
        %300 = vadd.xlane.f32.xlu0 %v299
        %v301 = vpop.xlane.xlu0 %300
        %v302 = vsel %vm222, %v298, 0.0
        %303 = vadd.xlane.f32.xlu0 %v302
        %v304 = vpop.xlane.xlu0 %303
        %v305 = vsub.f32 0.0, %v301
        %v306 = vsub.f32 0.0, %v304
        %v307 = vsel %vm220, %v305, 0.0
        %v308 = vsel %vm221, %v306, 0.0
        %vm309 = vcmask 7168
        %v310 = vsel %vm309, %v307, 0.0
        %v311 = vsel %vm309, %v308, 0.0
        %v312 = vadd.f32 %v310, %v311
        %313 = vadd.xlane.f32.xlu0 %v312
        %v314 = vpop.xlane.xlu0 %313
        %v315 = vrot.slane %v314, 4
        %v316 = vadd.f32 %v314, %v315
        %v317 = vrot.slane %v316, 2
        %v318 = vadd.f32 %v316, %v317
        %v319 = vrot.slane %v318, 1
        %v320 = vadd.f32 %v318, %v319
        %s321 = vtos %v320
        %v322 = vsel %vm220, 1, 0
        %v323 = vsel %vm221, 1, 0
        %v324 = vcvt.s32.f32 %v322
        %v325 = vcvt.s32.f32 %v323
        %v326 = vsel %vm309, %v324, 0.0
        %v327 = vsel %vm309, %v325, 0.0
        %v328 = vadd.f32 %v326, %v327
        %329 = vadd.xlane.f32.xlu0 %v328
        %v330 = vpop.xlane.xlu0 %329
        %v331 = vrot.slane %v330, 4
        %v332 = vadd.f32 %v330, %v331
        %v333 = vrot.slane %v332, 2
        %v334 = vadd.f32 %v332, %v333
        %v335 = vrot.slane %v334, 1
        %v336 = vadd.f32 %v334, %v335
        %s337 = vtos %v336
        %vm338 = vcmp.eq.s32.totalorder %v280, 0
        %vm339 = vcmp.eq.s32.totalorder %v280, 1
        %v340 = vstv %s337
        %v341 = vsel %vm339, %v340, 0.0
        %v342 = vstv %s321
        %v343 = vsel %vm338, %v342, %v341
        %344 = vst [vmem:[%s176] sm:$0x1] %v343
        %s345 = sand.u32 %s76, 1
        %s346 = scalar_lea.sflag [#allocation3], %s345
        %s347 = sand.u32 %s76, 1
        %s348 = scalar_lea.vmem [#allocation2], %s347
        // Predicated region
        $region29: #{tpu_custom_call.1} parent=27 // pred_check
          %p349 = pneg %p86
        $region30: #{tpu_custom_call.1} parent=27 // pred_check_branch
          %351 = sbr.rel (%p349) target = $region32
        $region31: #{tpu_custom_call.1} parent=27 // pred_region
          %353 = vsyncadd %s346, 0
          %s354 = scalar_lea.hbm %s2, %s16
          %s356 = sshll.u32 %s348, 4
          %s357 = int_to_ptr.vmem [resolvable:$true] %s356
          %s358 = sshll.u32 %s354, 4
          %s359 = int_to_ptr.hbm [resolvable:$true] %s358
          %361 = dma.vmem_to_hbm [thread:$0]  %s357, 16, %s359, %s346
        $region32: #{tpu_custom_call.1} parent=27 // pred_fallthru
          _
      $region28: #{tpu_custom_call.1} parent=5 // pred_fallthru
        _
      %p362 = scmp.le.s32.totalorder 2, %s11
      // Predicated region
      $region33: #{tpu_custom_call.1} parent=5 // pred_check
        %p363 = pneg %p362
      $region34: #{tpu_custom_call.1} parent=5 // pred_check_branch
        %365 = sbr.rel (%p363) target = $region36
      $region35: #{tpu_custom_call.1} parent=5 // pred_region
        %s366 = ssub.s32 %s11, 2
        // Predicated region
        $region37: #{tpu_custom_call.1} parent=35 // pred_check
          %p367 = pneg %p92
        $region38: #{tpu_custom_call.1} parent=35 // pred_check_branch
          %369 = sbr.rel (%p367) target = $region40
        $region39: #{tpu_custom_call.1} parent=35 // pred_region
          %s370 = sand.u32 %s77, 1
          %s371 = scalar_lea.sflag [#allocation3], %s370
          %s372 = sand.u32 %s77, 1
          %s373 = scalar_lea.vmem [#allocation2], %s372
          %375 = dma.done %s371, 16
        $region40: #{tpu_custom_call.1} parent=35 // pred_fallthru
          _
      $region36: #{tpu_custom_call.1} parent=5 // pred_fallthru
        _
    $region6: #{tpu_custom_call.1} parent=1 // loop_footer
      %s15 = sadd.s32 1, %s11
    $region7: #{tpu_custom_call.1} parent=1 // loop_footer_branch
      %10 = sbr.rel target = $region3
    $region8: #{tpu_custom_call.1} parent=1 // loop_exit
      _
    %376 = vsyncpa [#allocation3], 1
    %s377 = scalar_lea.sflag [#allocation3], 1
    %378 = vsyncpa %s377, 1

</llo_original>
